<compile_context>
chip_gen: v7x
topology: tpu7x:2x2x1
jax: 0.10.0
libtpu: 0.0.40
codegen_flags: <defaults>
</compile_context>

<pallas_src>
import jax
import jax.numpy as jnp
from jax.experimental import pallas as pl
from jax.experimental.pallas import tpu as pltpu


def _swiglu_kernel(x_ref, o_ref):
    # Block holds full 2*hidden rows; split with static (compile-time) slices.
    h = o_ref.shape[-1]
    x1 = x_ref[:, :h]
    x2 = x_ref[:, h:]
    # Compute in the input dtype (matches torch F.silu on bf16 tensors).
    o_ref[...] = (x1 * jax.nn.sigmoid(x1) * x2).astype(o_ref.dtype)


_ROW_GRANULE = {4: 8, 2: 16, 1: 32}   # sublane packing granule per itemsize
_TARGET_ROW_BLOCKS = 8                # >=2 for v7x megacore, >=4 for pipelining


def _vmem_budget_and_limit():
    """Generation-aware (block byte budget, scoped VMEM limit)."""
    try:
        info = pltpu.get_tpu_info()
        cap = getattr(info, "vmem_capacity_bytes", None)
    except Exception:
        cap = None
    if cap is None:
        # Unknown generation: conservative values safe on v5e/v6e/v7x.
        return 24 << 20, 48 << 20
    if cap >= (100 << 20):
        # v5e/v6e: 128 MiB physical VMEM.  Big blocks, ~2x headroom for the
        # limit (v5e upcasts sub-32-bit dtypes to f32 internally).
        return 48 << 20, 96 << 20
    # v7x: 64 MiB physical VMEM per TensorCore.
    return 32 << 20, 52 << 20


def swiglu(x):
    """x: (..., 2*hidden) -> (..., hidden); same semantics as F.silu(x1) * x2."""
    *lead, d = x.shape
    assert d % 2 == 0, "last dim must be even for SwiGLU"
    h = d // 2
    n = 1
    for s in lead:
        n *= s
    x2d = x.reshape(n, d)

    itemsize = jnp.dtype(x.dtype).itemsize
    granule = _ROW_GRANULE.get(itemsize, 8)
    budget, vmem_limit = _vmem_budget_and_limit()

    # Bytes per row per pipeline stage: input (2h) + output (h), x2 buffers.
    bytes_per_row = 6 * h * itemsize
    rows_budget = max(budget // bytes_per_row, 1)

    if n <= granule:
        # Full-extent tiny block: equals the array dim -> always layout-legal.
        tile_rows = n
    else:
        # Byte-budgeted rows, but also leave >= ~_TARGET_ROW_BLOCKS blocks so
        # both v7x cores get balanced work and the pipeline has steps to hide
        # DMA behind.  (For huge hidden sizes rows_budget bottoms out at the
        # granule; exceeding the budget would need hidden > ~250K, so the 2x
        # limit headroom covers it.)
        rows_cap = pl.cdiv(pl.cdiv(n, _TARGET_ROW_BLOCKS), granule) * granule
        tile_rows = min(rows_budget, rows_cap)
        tile_rows = max((tile_rows // granule) * granule, granule)
        tile_rows = min(tile_rows, pl.cdiv(n, granule) * granule)

    grid = (pl.cdiv(n, tile_rows),)   # partial last block masked by Pallas

    out2d = pl.pallas_call(
        _swiglu_kernel,
        out_shape=jax.ShapeDtypeStruct((n, h), x.dtype),
        grid_spec=pltpu.PrefetchScalarGridSpec(
            num_scalar_prefetch=0,
            grid=grid,
            in_specs=[pl.BlockSpec((tile_rows, d), lambda i: (i, 0))],
            out_specs=pl.BlockSpec((tile_rows, h), lambda i: (i, 0)),
        ),
        compiler_params=pltpu.CompilerParams(
            dimension_semantics=("parallel",),
            vmem_limit_bytes=vmem_limit),
    )(x2d)

    return out2d.reshape(*lead, h)


def swiglu_ref(x):
    h = x.shape[-1] // 2
    x1, x2 = x[..., :h], x[..., h:]
    return jax.nn.silu(x1) * x2


if __name__ == "__main__":
    key = jax.random.PRNGKey(0)
    k1, k2, k3 = jax.random.split(key, 3)

    # 1) module-scale smoke test (hidden=32 -> unaligned in-kernel split)
    batch, seq, hidden = 2, 8, 32
    x = jax.random.normal(k1, (batch, seq, 2 * hidden), dtype=jnp.float32)
    out = jax.block_until_ready(swiglu(x))
    ref = swiglu_ref(x)
    assert out.shape == (batch, seq, hidden), out.shape
    assert jnp.allclose(out, ref, atol=1e-5, rtol=1e-5), "mismatch (hidden=32)"

    # 2) lane-aligned hidden (multiple of 128 -> split is a free vreg view)
    hidden_a = 128
    xa = jax.random.normal(k2, (batch, seq, 2 * hidden_a), dtype=jnp.float32)
    outa = jax.block_until_ready(swiglu(xa))
    refa = swiglu_ref(xa)
    assert outa.shape == (batch, seq, hidden_a), outa.shape
    assert jnp.allclose(outa, refa, atol=1e-5, rtol=1e-5), "mismatch (hidden=128)"

    # 3) bf16 tolerance check (compute stays in bf16, like torch F.silu on bf16)
    xb = jax.random.normal(
        k3, (batch, seq, 2 * hidden_a), dtype=jnp.float32).astype(jnp.bfloat16)
    outb = jax.block_until_ready(swiglu(xb))
    refb = swiglu_ref(xb.astype(jnp.float32))
    assert outb.shape == (batch, seq, hidden_a), outb.shape
    assert jnp.allclose(outb.astype(jnp.float32), refb, atol=2e-2, rtol=2e-2), \
        "mismatch (bf16)"

    print("KERNEL_OK")
</pallas_src>

<mosaic_0001>
module attributes {stable_mosaic.version = 11 : i64} {
  func.func @_swiglu_kernel(%arg0: i32, %arg1: memref<8x64xf32, #tpu.memory_space<vmem>>, %arg2: memref<8x32xf32, #tpu.memory_space<vmem>>) attributes {dimension_semantics = [#tpu.dimension_semantics<parallel>], iteration_bounds = array<i64: 2>, scalar_prefetch = 0 : i64, scratch_operands = 0 : i64, tpu.core_type = #tpu.core_type<tc>, window_params = [{transform_indices = @transform_0, window_bounds = array<i64: 8, 64>}, {transform_indices = @transform_1, window_bounds = array<i64: 8, 32>}]} {
    %c0 = arith.constant 0 : index
    %c0_0 = arith.constant 0 : index
    %0 = vector.load %arg1[%c0, %c0_0] : memref<8x64xf32, #tpu.memory_space<vmem>>, vector<8x32xf32>
    %c0_1 = arith.constant 0 : index
    %c32 = arith.constant 32 : index
    %1 = vector.load %arg1[%c0_1, %c32] : memref<8x64xf32, #tpu.memory_space<vmem>>, vector<8x32xf32>
    %2 = arith.negf %0 : vector<8x32xf32>
    %3 = math.exp %2 : vector<8x32xf32>
    %cst = arith.constant 1.000000e+00 : f32
    %4 = vector.broadcast %cst : f32 to vector<8x32xf32>
    %5 = arith.addf %4, %3 : vector<8x32xf32>
    %6 = arith.divf %4, %5 : vector<8x32xf32>
    %7 = arith.mulf %0, %6 : vector<8x32xf32>
    %8 = arith.mulf %7, %1 : vector<8x32xf32>
    %c0_2 = arith.constant 0 : index
    %c0_3 = arith.constant 0 : index
    %9 = vector.load %arg2[%c0_2, %c0_3] : memref<8x32xf32, #tpu.memory_space<vmem>>, vector<8x32xf32>
    tpu.vector_store %arg2[%c0_2, %c0_3], %8 {strides = array<i32>} : memref<8x32xf32, #tpu.memory_space<vmem>>, vector<8x32xf32>,
    return
  }
  func.func @transform_0(%arg0: i32) -> (i32, i32) {
    %c0_i32 = arith.constant 0 : i32
    %c0_i32_0 = arith.constant 0 : i32
    return %arg0, %c0_i32 : i32, i32
  }
  func.func @transform_1(%arg0: i32) -> (i32, i32) {
    %c0_i32 = arith.constant 0 : i32
    %c0_i32_0 = arith.constant 0 : i32
    return %arg0, %c0_i32 : i32, i32
  }
}

</mosaic_0001>

<llo_original>
// kernel: tpu_custom_call.1
$region0: #{tpu_custom_call.1}
  #allocation0 [shape = 'u32[]', space=smem, size = 0x4, offset = 0x4, fixed_abs, tag = 'smem constant byte address 0x4 - core index']
  #allocation1 [shape = 'u32[144,128]{1,0:T(1,128)}', space=vmem, size = 0x12000, scoped, tag = 'internal scratch']
  %s0 = inlined_call_operand.hbm [shape: f32[16,64], index: 0, kind: input, shape index: {}]
  %s1 = inlined_call_operand.hbm [shape: f32[16,32], index: 1, kind: output, shape index: {}]
  %s2 = sld [smem:[#allocation0]]
  $region41: #{tpu_custom_call.1} parent=0
    _
  %s4 = ssub.s32 1, %s2
  %s5 = scalar_select 0, %s4, %s2
  $region1: #{tpu_custom_call.1} parent=0
    #allocation2 [shape = 'u8[8192]{0}', space=vmem, size = 0x2000, scoped, tag = 'input window, operand 0']
    #allocation3 [shape = 's32[2]{0}', space=sflag, size = 0x8, scoped, tag = 'scoped memory for tpu_custom_call.1']
    #allocation4 [shape = 's32[2]{0}', space=sflag, size = 0x8, scoped, tag = 'scoped memory for tpu_custom_call.1']
    #allocation5 [shape = 'u8[8192]{0}', space=vmem, size = 0x2000, scoped, tag = 'output window, operand 0']
    %6 = vsyncpa [#allocation3], 0
    %s7 = scalar_lea.sflag [#allocation3], 1
    %8 = vsyncpa %s7, 0
    %9 = vsyncpa [#allocation4], 0
    %s10 = scalar_lea.sflag [#allocation4], 1
    %11 = vsyncpa %s10, 0
    loop: start=0, step=1, limit=4
    $region2: #{tpu_custom_call.1} parent=1 // loop_pre_header
      _
    $region3: #{tpu_custom_call.1} parent=1 // loop_header
      %s13 = sphi 0, %s17
      %p14 = scmp.ge.s32.totalorder %s13, 4
      %s23 = sphi 0, %s25
      %s26 = sphi 0, %s23
      %s27 = sphi 0, %s26
      %s43 = sphi 0, %s27
      %s49 = sphi 0, %s51
      %s52 = sphi 0, %s49
      %s53 = sphi 0, %s52
      %s69 = sphi 0, %s53
    $region4: #{tpu_custom_call.1} parent=1 // loop_header_branch
      %16 = sbr.rel (%p14) target = $region8
    $region5: #{tpu_custom_call.1} parent=1 // loop_body
      %s18 = ssub.s32 %s13, 1
      %s19 = ssub.s32 %s13, 2
      %s20 = sadd.s32 %s13, 1
      %s21 = ssub.s32 %s13, %s20
      %p22 = scmp.eq.s32.totalorder %s21, 0
      %s24 = sadd.s32 %s23, 1
      %s25 = scalar_select %p22, %s23, %s24
      %p28 = pneg %p22
      %p29 = scmp.eq.s32.totalorder %s13, 1
      %p30 = por %p28, %p29
      %p31 = scmp.ne.s32.totalorder %s23, %s26
      %p32 = scmp.eq.s32.totalorder %s13, 0
      %p33 = por %p31, %p32
      %p34 = scmp.ne.s32.totalorder %s23, %s26
      %p35 = scmp.eq.s32.totalorder %s18, 1
      %p36 = por %p34, %p35
      %p37 = scmp.ne.s32.totalorder %s26, %s27
      %p38 = scmp.eq.s32.totalorder %s18, 0
      %p39 = por %p37, %p38
      %p40 = scmp.ne.s32.totalorder %s26, %s27
      %p41 = scmp.eq.s32.totalorder %s19, 1
      %p42 = por %p40, %p41
      %p44 = scmp.ne.s32.totalorder %s27, %s43
      %p45 = scmp.eq.s32.totalorder %s19, 0
      %p46 = por %p44, %p45
      %s47 = ssub.s32 %s13, %s20
      %p48 = scmp.eq.s32.totalorder %s47, 0
      %s50 = sadd.s32 %s49, 1
      %s51 = scalar_select %p48, %s49, %s50
      %p54 = pneg %p48
      %p55 = scmp.eq.s32.totalorder %s13, 1
      %p56 = por %p54, %p55
      %p57 = scmp.ne.s32.totalorder %s49, %s52
      %p58 = scmp.eq.s32.totalorder %s13, 0
      %p59 = por %p57, %p58
      %p60 = scmp.ne.s32.totalorder %s49, %s52
      %p61 = scmp.eq.s32.totalorder %s18, 1
      %p62 = por %p60, %p61
      %p63 = scmp.ne.s32.totalorder %s52, %s53
      %p64 = scmp.eq.s32.totalorder %s18, 0
      %p65 = por %p63, %p64
      %p66 = scmp.ne.s32.totalorder %s52, %s53
      %p67 = scmp.eq.s32.totalorder %s19, 1
      %p68 = por %p66, %p67
      %p70 = scmp.ne.s32.totalorder %s53, %s69
      %p71 = scmp.eq.s32.totalorder %s19, 0
      %p72 = por %p70, %p71
      %p73 = scmp.le.s32.totalorder 1, %s13
      %p74 = scmp.lt.s32.totalorder %s13, 3
      %p75 = pnand %p73, %p74
      %p76 = pneg %p75
      // Predicated region
      $region9: #{tpu_custom_call.1} parent=5 // pred_check
        _
      $region10: #{tpu_custom_call.1} parent=5 // pred_check_branch
        %78 = sbr.rel (%p75) target = $region12
      $region11: #{tpu_custom_call.1} parent=5 // pred_region
        %s79 = ssub.s32 %s13, 1
      $region12: #{tpu_custom_call.1} parent=5 // pred_fallthru
        _
      %p80 = scmp.lt.s32.totalorder %s13, 2
      // Predicated region
      $region13: #{tpu_custom_call.1} parent=5 // pred_check
        %p81 = pneg %p80
      $region14: #{tpu_custom_call.1} parent=5 // pred_check_branch
        %83 = sbr.rel (%p81) target = $region16
      $region15: #{tpu_custom_call.1} parent=5 // pred_region
        // Predicated region
        $region17: #{tpu_custom_call.1} parent=15 // pred_check
          %p84 = pneg %p33
        $region18: #{tpu_custom_call.1} parent=15 // pred_check_branch
          %86 = sbr.rel (%p84) target = $region20
        $region19: #{tpu_custom_call.1} parent=15 // pred_region
          %s87 = sand.u32 %s23, 1
          %s88 = scalar_lea.sflag [#allocation3], %s87
          %s89 = sand.u32 %s23, 1
          %s90 = smul.addr %s89, 8
          %s91 = scalar_lea.vmem [#allocation2], %s90
          %s93 = ssub.s32 128, 128
          %94 = vsyncadd %s88, %s93
          %s95 = smul.addr %s13, 128
          %s96 = scalar_lea.hbm %s0, %s95
          %s98 = sshll.u32 %s91, 4
          %s99 = int_to_ptr.vmem [resolvable:$true] %s98
          %101 = dma.hbm_to_vmem [thread:$0]  %s96, 128, %s99, %s88
        $region20: #{tpu_custom_call.1} parent=15 // pred_fallthru
          _
      $region16: #{tpu_custom_call.1} parent=5 // pred_fallthru
        _
      %p102 = scmp.le.s32.totalorder 1, %s13
      %p103 = scmp.lt.s32.totalorder %s13, 3
      %p104 = pnand %p102, %p103
      %p105 = pneg %p104
      // Predicated region
      $region21: #{tpu_custom_call.1} parent=5 // pred_check
        _
      $region22: #{tpu_custom_call.1} parent=5 // pred_check_branch
        %107 = sbr.rel (%p104) target = $region24
      $region23: #{tpu_custom_call.1} parent=5 // pred_region
        %s108 = ssub.s32 %s13, 1
        %s109 = sand.u32 %s26, 1
        %s110 = scalar_lea.sflag [#allocation3], %s109
        %s111 = sand.u32 %s26, 1
        %s112 = smul.addr %s111, 8
        %s113 = scalar_lea.vmem [#allocation2], %s112
        // Predicated region
        $region25: #{tpu_custom_call.1} parent=23 // pred_check
          %p114 = pneg %p39
        $region26: #{tpu_custom_call.1} parent=23 // pred_check_branch
          %116 = sbr.rel (%p114) target = $region28
        $region27: #{tpu_custom_call.1} parent=23 // pred_region
          %117 = dma.done %s110, 128
        $region28: #{tpu_custom_call.1} parent=23 // pred_fallthru
          _
        %s118 = sand.u32 %s26, 1
        %s119 = scalar_lea.sflag [#allocation3], %s118
        %s120 = sand.u32 %s26, 1
        %s121 = smul.addr %s120, 8
        %s122 = scalar_lea.vmem [#allocation2], %s121
        %p123 = pneg %p39
        %p124 = pneg %p36
        %p125 = pneg %p65
        %p126 = pneg %p62
        %s127 = sand.u32 %s52, 1
        %s128 = scalar_lea.sflag [#allocation4], %s127
        %s129 = sand.u32 %s52, 1
        %s130 = smul.addr %s129, 8
        %s131 = scalar_lea.vmem [#allocation5], %s130
        %v132 = vld [vmem:[%s113] sm:$0xff]
        %v133 = vxor.u32 %v132, 2147483648
        %v134 = vmul.f32 %v133, 1.442695
        %v135 = vpow.pop %v134
        %v136 = vadd.f32 %v135, 1.0
        %v137 = vrcp.pop %v136
        %v138 = vmul.f32 1.0, %v137
        %v139 = vmul.f32 %v132, %v138
        %141 = vrot.lane.b32.xlu0 %v132, 96
        %v142 = vpop.permute.xlu0 %141
        %v144 = vmul.f32 %v139, %v142
        %vm145 = vcmask 261120
        %146 = vst.msk [vmem:[%s131] sm:$0xff] %vm145, %v144
        %s147 = sand.u32 %s52, 1
        %s148 = scalar_lea.sflag [#allocation4], %s147
        %s149 = sand.u32 %s52, 1
        %s150 = smul.addr %s149, 8
        %s151 = scalar_lea.vmem [#allocation5], %s150
        // Predicated region
        $region29: #{tpu_custom_call.1} parent=23 // pred_check
          %p152 = pneg %p62
        $region30: #{tpu_custom_call.1} parent=23 // pred_check_branch
          %154 = sbr.rel (%p152) target = $region32
        $region31: #{tpu_custom_call.1} parent=23 // pred_region
          %s156 = ssub.s32 128, 128
          %157 = vsyncadd %s148, %s156
          %s158 = smul.addr %s18, 128
          %s159 = scalar_lea.hbm %s1, %s158
          %s161 = sshll.u32 %s151, 4
          %s162 = int_to_ptr.vmem [resolvable:$true] %s161
          %164 = dma.vmem_to_hbm [thread:$0]  %s162, 128, %s159, %s148
        $region32: #{tpu_custom_call.1} parent=23 // pred_fallthru
          _
      $region24: #{tpu_custom_call.1} parent=5 // pred_fallthru
        _
      %p165 = scmp.le.s32.totalorder 2, %s13
      // Predicated region
      $region33: #{tpu_custom_call.1} parent=5 // pred_check
        %p166 = pneg %p165
      $region34: #{tpu_custom_call.1} parent=5 // pred_check_branch
        %168 = sbr.rel (%p166) target = $region36
      $region35: #{tpu_custom_call.1} parent=5 // pred_region
        %s169 = ssub.s32 %s13, 2
        // Predicated region
        $region37: #{tpu_custom_call.1} parent=35 // pred_check
          %p170 = pneg %p68
        $region38: #{tpu_custom_call.1} parent=35 // pred_check_branch
          %172 = sbr.rel (%p170) target = $region40
        $region39: #{tpu_custom_call.1} parent=35 // pred_region
          %s173 = sand.u32 %s53, 1
          %s174 = scalar_lea.sflag [#allocation4], %s173
          %s175 = sand.u32 %s53, 1
          %s176 = smul.addr %s175, 8
          %s177 = scalar_lea.vmem [#allocation5], %s176
          %178 = dma.done %s174, 128
        $region40: #{tpu_custom_call.1} parent=35 // pred_fallthru
          _
      $region36: #{tpu_custom_call.1} parent=5 // pred_fallthru
        _
    $region6: #{tpu_custom_call.1} parent=1 // loop_footer
      %s17 = sadd.s32 1, %s13
    $region7: #{tpu_custom_call.1} parent=1 // loop_footer_branch
      %12 = sbr.rel target = $region3
    $region8: #{tpu_custom_call.1} parent=1 // loop_exit
      _
    %179 = vsyncpa [#allocation3], 1
    %s180 = scalar_lea.sflag [#allocation3], 1
    %181 = vsyncpa %s180, 1
    %182 = vsyncpa [#allocation4], 1
    %s183 = scalar_lea.sflag [#allocation4], 1
    %184 = vsyncpa %s183, 1

</llo_original>
